<compile_context>
chip_gen: v6e
topology: v6e:2x2x1
jax: 0.10.0
libtpu: 0.0.40
codegen_flags: <defaults>
</compile_context>

<pallas_src>
import jax
import jax.numpy as jnp
from jax.experimental import pallas as pl
from jax.experimental.pallas import tpu as pltpu


def _row_linear_kernel(rows_ref, x_ref, w_ref, o_ref):
    # rows_ref: SMEM scalar-prefetch ref (consumed by the index_maps only).
    # x_ref:    (B, n_in)         bf16, resident across the grid
    # w_ref:    (n_in, n_out_pad) bf16, selected row's W^T (leading dim squeezed)
    # o_ref:    (B, n_out_pad)    f32, lane-dense output block
    o_ref[...] = jnp.dot(
        x_ref[...], w_ref[...], preferred_element_type=jnp.float32
    ).astype(o_ref.dtype)


def row_linear_padded(rows, x, w_stacked, *, out_dtype=jnp.float32):
    """y[r] = x @ W_{rows[r]}^T (padded) for every requested row, in ONE call.

    Args:
      rows:      (R,) int32 row indices (already clamped to valid range).
      x:         (B, n_in) activations (bf16 recommended).
      w_stacked: (num_rows, n_in, n_out_pad) pre-transposed, zero-padded,
                 bf16 weights; n_out_pad % 128 == 0.

    Returns:
      (R, B, n_out_pad); caller slices [..., :n_out_row] if/when needed.
    """
    B, n_in = x.shape
    num_rows, n_in_w, n_out_pad = w_stacked.shape
    assert n_in == n_in_w, (n_in, n_in_w)
    assert n_out_pad % 128 == 0, n_out_pad
    (R,) = rows.shape

    grid_spec = pltpu.PrefetchScalarGridSpec(
        num_scalar_prefetch=1,
        grid=(R,),
        in_specs=[
            # x: constant block index -> stays resident in VMEM across rows.
            pl.BlockSpec((B, n_in), lambda i, rows_ref: (0, 0)),
            # Weight: only the selected row's (n_in, n_out_pad) slab is DMA'd;
            # double-buffered across grid steps by the auto-pipeliner.
            pl.BlockSpec(
                (pl.Squeezed(), n_in, n_out_pad),
                lambda i, rows_ref: (rows_ref[i], 0, 0),
            ),
        ],
        out_specs=pl.BlockSpec(
            (pl.Squeezed(), B, n_out_pad), lambda i, rows_ref: (i, 0, 0)
        ),
    )

    flops = 2 * R * B * n_in * n_out_pad
    bytes_accessed = (
        x.size * x.dtype.itemsize                               # x (resident, read once)
        + R * n_in * n_out_pad * w_stacked.dtype.itemsize       # weight slabs
        + R * B * n_out_pad * jnp.dtype(out_dtype).itemsize     # outputs
    )

    return pl.pallas_call(
        _row_linear_kernel,
        out_shape=jax.ShapeDtypeStruct((R, B, n_out_pad), out_dtype),
        grid_spec=grid_spec,
        compiler_params=pltpu.CompilerParams(
            # Independent rows: shard across TensorCores on v7x megacore.
            dimension_semantics=("parallel",),
            # Explicit budget that is safe on v5e (16 MiB default scoped),
            # v6e (128 MiB physical) and v7x (64 MiB physical).
            vmem_limit_bytes=32 * 1024 * 1024,
        ),
        cost_estimate=pl.CostEstimate(
            flops=flops, transcendentals=0, bytes_accessed=bytes_accessed
        ),
    )(rows, x, w_stacked)


class RowBilinearPallas:
    """JAX/Pallas equivalent of RowBilinear.

    The PyTorch module allocates uninitialized nn.Parameter tensors; here we
    initialize deterministically with a fixed PRNG.  Logical (n_out, n_in)
    f32 weights are kept for reference/export; the kernel consumes a single
    pre-transposed, lane-padded, stacked bf16 array.
    """

    def __init__(self, n_in, kernel_shapes, pad=0, key=None):
        if key is None:
            key = jax.random.PRNGKey(0)
        self.pad = pad
        self.n_in = n_in
        self.weights = []   # logical (n_out_i, n_in) f32 weights, like nn.Linear
        self.n_outs = []
        for (kH, kW) in kernel_shapes:
            n_out = (int(kH) + 2 * pad) * (int(kW) + 2 * pad)
            key, sub = jax.random.split(key)
            w = 0.02 * jax.random.normal(sub, (n_out, n_in), dtype=jnp.float32)
            self.weights.append(w)
            self.n_outs.append(n_out)
        self.num_rows = len(self.weights)

        # Stack pre-transposed, zero-padded weights: (num_rows, n_in, n_out_pad).
        max_n_out = max(self.n_outs)
        self.n_out_pad = ((max_n_out + 127) // 128) * 128
        stacked = jnp.zeros(
            (self.num_rows, n_in, self.n_out_pad), dtype=jnp.float32
        )
        for i, w in enumerate(self.weights):
            # Zero-padded columns guarantee the extra lanes contribute nothing.
            stacked = stacked.at[i, :, : self.n_outs[i]].set(w.T)
        # bf16 is the MXU-native datapath; accumulation stays f32 in-kernel.
        self.w_stacked = stacked.astype(jnp.bfloat16)
        # TODO(synk): if rows are never needed in logical f32 form, drop
        # self.weights to avoid holding the parameters twice.

    def forward_rows(self, x, rows):
        """Apply several transform rows to the same x in one pallas_call.

        Returns the padded (R, B, n_out_pad) f32 buffer; valid widths are
        self.n_outs[row] (consumers may read the padded buffer directly).
        """
        rows = jnp.clip(
            jnp.asarray(rows, dtype=jnp.int32), 0, self.num_rows - 1
        )
        return row_linear_padded(rows, x.astype(jnp.bfloat16), self.w_stacked)

    def __call__(self, x, row):
        """Torch-equivalent forward(x, row) -> (B, n_out_row)."""
        y = self.forward_rows(x, [row])
        return y[0, :, : self.n_outs[row]]


if __name__ == "__main__":
    key = jax.random.PRNGKey(0)

    n_in = 32
    batch = 8
    pad = 1
    # kernel_shapes analogous to the torch.LongTensor passed to __init__
    kernel_shapes = [(3, 3), (5, 5)]  # -> n_out = 25 and 49 respectively

    k_x, k_mod = jax.random.split(key)
    x = jax.random.normal(k_x, (batch, n_in), dtype=jnp.float32)

    module = RowBilinearPallas(n_in, kernel_shapes, pad=pad, key=k_mod)

    x_bf = x.astype(jnp.bfloat16)
    rows = list(range(len(kernel_shapes)))
    ok = True

    # Batched path: every row against the same x in ONE pallas_call.
    y_all = jax.block_until_ready(module.forward_rows(x, rows))
    if y_all.shape != (len(rows), batch, module.n_out_pad):
        ok = False

    for row in rows:
        n_out_expected = (kernel_shapes[row][0] + 2 * pad) * (
            kernel_shapes[row][1] + 2 * pad
        )
        # Reference using exactly the bf16 weights the kernel consumes.
        w_eff = module.w_stacked[row, :, :n_out_expected]  # (n_in, n_out) bf16
        ref = jnp.dot(x_bf, w_eff, preferred_element_type=jnp.float32)

        # Single-row, torch-equivalent forward.
        out = jax.block_until_ready(module(x, row))
        if out.shape != (batch, n_out_expected):
            ok = False
        if not jnp.allclose(out, ref, atol=1e-5, rtol=1e-5):
            ok = False

        # Batched output for the same row.
        if not jnp.allclose(
            y_all[row, :, :n_out_expected], ref, atol=1e-5, rtol=1e-5
        ):
            ok = False

    if ok:
        print("KERNEL_OK")
    else:
        print("KERNEL_MISMATCH")
</pallas_src>

<mosaic_0001>
module attributes {stable_mosaic.version = 11 : i64} {
  func.func @_row_linear_kernel(%arg0: i32, %arg1: memref<2xi32, #tpu.memory_space<smem>>, %arg2: memref<8x32xbf16, #tpu.memory_space<vmem>>, %arg3: memref<1x32x128xbf16, #tpu.memory_space<vmem>>, %arg4: memref<1x8x128xf32, #tpu.memory_space<vmem>>) attributes {dimension_semantics = [#tpu.dimension_semantics<parallel>], iteration_bounds = array<i64: 2>, scalar_prefetch = 1 : i64, scratch_operands = 0 : i64, tpu.core_type = #tpu.core_type<tc>, window_params = [{pipeline_mode = #tpu.pipeline_mode<synchronous>, transform_indices = @transform_0, window_bounds = array<i64: 8, 32>}, {transform_indices = @transform_1, window_bounds = array<i64: 1, 32, 128>}, {transform_indices = @transform_2, window_bounds = array<i64: 1, 8, 128>}]} {
    %c0 = arith.constant 0 : index
    %c0_0 = arith.constant 0 : index
    %0 = vector.load %arg2[%c0, %c0_0] : memref<8x32xbf16, #tpu.memory_space<vmem>>, vector<8x32xbf16>
    %c0_1 = arith.constant 0 : index
    %c0_2 = arith.constant 0 : index
    %c0_3 = arith.constant 0 : index
    %1 = vector.load %arg3[%c0_1, %c0_2, %c0_3] : memref<1x32x128xbf16, #tpu.memory_space<vmem>>, vector<1x32x128xbf16>
    %2 = vector.shape_cast %1 : vector<1x32x128xbf16> to vector<32x128xbf16>
    %cst = arith.constant dense<0.000000e+00> : vector<8x128xf32>
    %3 = tpu.matmul %0, %2, %cst {dimension_numbers = #tpu.dot_dimension_numbers<[1], [0], [0], [1], [0, 0, 1, 1], [], []>} : vector<8x32xbf16>, vector<32x128xbf16>, vector<8x128xf32> -> vector<8x128xf32>
    %c0_4 = arith.constant 0 : index
    %c0_5 = arith.constant 0 : index
    %c0_6 = arith.constant 0 : index
    %4 = vector.load %arg4[%c0_4, %c0_5, %c0_6] : memref<1x8x128xf32, #tpu.memory_space<vmem>>, vector<1x8x128xf32>
    %5 = vector.shape_cast %4 : vector<1x8x128xf32> to vector<8x128xf32>
    %6 = vector.shape_cast %3 : vector<8x128xf32> to vector<1x8x128xf32>
    tpu.vector_store %arg4[%c0_4, %c0_5, %c0_6], %6 {strides = array<i32>} : memref<1x8x128xf32, #tpu.memory_space<vmem>>, vector<1x8x128xf32>,
    return
  }
  func.func @transform_0(%arg0: i32, %arg1: memref<2xi32, #tpu.memory_space<smem>>) -> (i32, i32) {
    %c0_i32 = arith.constant 0 : i32
    %c0_i32_0 = arith.constant 0 : i32
    %c0_i32_1 = arith.constant 0 : i32
    return %c0_i32, %c0_i32_0 : i32, i32
  }
  func.func @transform_1(%arg0: i32, %arg1: memref<2xi32, #tpu.memory_space<smem>>) -> (i32, i32, i32) {
    %0 = arith.index_cast %arg0 : i32 to index
    %1 = memref.load %arg1[%0] : memref<2xi32, #tpu.memory_space<smem>>
    %c0_i32 = arith.constant 0 : i32
    %c0_i32_0 = arith.constant 0 : i32
    %c0_i32_1 = arith.constant 0 : i32
    return %1, %c0_i32, %c0_i32_0 : i32, i32, i32
  }
  func.func @transform_2(%arg0: i32, %arg1: memref<2xi32, #tpu.memory_space<smem>>) -> (i32, i32, i32) {
    %c0_i32 = arith.constant 0 : i32
    %c0_i32_0 = arith.constant 0 : i32
    %c0_i32_1 = arith.constant 0 : i32
    return %arg0, %c0_i32, %c0_i32_0 : i32, i32, i32
  }
}

</mosaic_0001>

<llo_original>
// kernel: tpu_custom_call.1
$region0: #{tpu_custom_call.1}
  #allocation0 [shape = 'u32[]', space=smem, size = 0x4, offset = 0x4, fixed_abs, tag = 'smem constant byte address 0x4 - core index']
  #allocation1 [shape = 'u32[144,128]{1,0:T(1,128)}', space=vmem, size = 0x12000, scoped, tag = 'internal scratch']
  #allocation2 [shape = 's32[1]{0}', space=sflag, size = 0x4, scoped, tag = 'scoped memory for tpu_custom_call.1']
  #allocation3 [shape = 'u8[512]{0}', space=smem, size = 0x200, scoped, tag = 'prefetched SMEM operand 0']
  %s0 = inlined_call_operand.hbm [shape: s32[2], index: 0, kind: input, shape index: {}]
  %s1 = inlined_call_operand.hbm [shape: bf16[8,32], index: 1, kind: input, shape index: {}]
  %s2 = inlined_call_operand.hbm [shape: bf16[2,32,128], index: 2, kind: input, shape index: {}]
  %s3 = inlined_call_operand.hbm [shape: f32[2,8,128], index: 3, kind: output, shape index: {}]
  %s4 = sld [smem:[#allocation0]]
  $region49: #{tpu_custom_call.1} parent=0
    _
  %s6 = ssub.s32 1, %s4
  %s7 = scalar_select 0, %s6, %s4
  %9 = dma.hbm_to_smem %s0, 16, [#allocation3], [#allocation2]
  %10 = dma.done [#allocation2], 16
  %11 = sfence
  $region1: #{tpu_custom_call.1} parent=0
    #allocation4 [shape = 'u8[2048]{0}', space=vmem, size = 0x800, scoped, tag = 'input window, operand 1, single buffered']
    #allocation5 [shape = 's32[2]{0}', space=sflag, size = 0x8, scoped, tag = 'scoped memory for tpu_custom_call.1']
    #allocation6 [shape = 's32[2]{0}', space=sflag, size = 0x8, scoped, tag = 'scoped memory for tpu_custom_call.1']
    #allocation7 [shape = 'u8[16384]{0}', space=vmem, size = 0x4000, scoped, tag = 'input window, operand 2']
    #allocation8 [shape = 's32[2]{0}', space=sflag, size = 0x8, scoped, tag = 'scoped memory for tpu_custom_call.1']
    #allocation9 [shape = 'u8[8192]{0}', space=vmem, size = 0x2000, scoped, tag = 'output window, operand 0']
    %12 = vsyncpa [#allocation5], 0
    %13 = vsyncpa [#allocation8], 0
    %s14 = scalar_lea.sflag [#allocation8], 1
    %15 = vsyncpa %s14, 0
    %16 = vsyncpa [#allocation6], 0
    %s17 = scalar_lea.sflag [#allocation6], 1
    %18 = vsyncpa %s17, 0
    loop: start=0, step=1, limit=4
    $region2: #{tpu_custom_call.1} parent=1 // loop_pre_header
      _
    $region3: #{tpu_custom_call.1} parent=1 // loop_header
      %s20 = sphi 0, %s24
      %p21 = scmp.ge.s32.totalorder %s20, 4
      %s28 = sphi 0, %s28
      %s30 = sphi 0, %s28
      %s31 = sphi 0, %s30
      %s45 = sphi 0, %s31
      %s53 = sphi 0, %s55
      %s56 = sphi 0, %s53
      %s57 = sphi 0, %s56
      %s73 = sphi 0, %s57
      %s79 = sphi 0, %s81
      %s82 = sphi 0, %s79
      %s83 = sphi 0, %s82
      %s99 = sphi 0, %s83
    $region4: #{tpu_custom_call.1} parent=1 // loop_header_branch
      %23 = sbr.rel (%p21) target = $region8
    $region5: #{tpu_custom_call.1} parent=1 // loop_body
      %s25 = ssub.s32 %s20, 1
      %s26 = ssub.s32 %s20, 2
      %s27 = sadd.s32 %s20, 1
      %s29 = sadd.s32 %s28, 1
      %p32 = scmp.eq.s32.totalorder %s20, 1
      %p33 = scmp.ne.s32.totalorder %s28, %s30
      %p34 = scmp.eq.s32.totalorder %s20, 0
      %p35 = por %p33, %p34
      %p36 = scmp.ne.s32.totalorder %s28, %s30
      %p37 = scmp.eq.s32.totalorder %s25, 1
      %p38 = por %p36, %p37
      %p39 = scmp.ne.s32.totalorder %s30, %s31
      %p40 = scmp.eq.s32.totalorder %s25, 0
      %p41 = por %p39, %p40
      %p42 = scmp.ne.s32.totalorder %s30, %s31
      %p43 = scmp.eq.s32.totalorder %s26, 1
      %p44 = por %p42, %p43
      %p46 = scmp.ne.s32.totalorder %s31, %s45
      %p47 = scmp.eq.s32.totalorder %s26, 0
      %p48 = por %p46, %p47
      %s49 = sld [smem:[#allocation3 + %s20]]
      %s50 = sld [smem:[#allocation3 + %s27]]
      %s51 = ssub.s32 %s49, %s50
      %p52 = scmp.eq.s32.totalorder %s51, 0
      %s54 = sadd.s32 %s53, 1
      %s55 = scalar_select %p52, %s53, %s54
      %p58 = pneg %p52
      %p59 = scmp.eq.s32.totalorder %s20, 1
      %p60 = por %p58, %p59
      %p61 = scmp.ne.s32.totalorder %s53, %s56
      %p62 = scmp.eq.s32.totalorder %s20, 0
      %p63 = por %p61, %p62
      %p64 = scmp.ne.s32.totalorder %s53, %s56
      %p65 = scmp.eq.s32.totalorder %s25, 1
      %p66 = por %p64, %p65
      %p67 = scmp.ne.s32.totalorder %s56, %s57
      %p68 = scmp.eq.s32.totalorder %s25, 0
      %p69 = por %p67, %p68
      %p70 = scmp.ne.s32.totalorder %s56, %s57
      %p71 = scmp.eq.s32.totalorder %s26, 1
      %p72 = por %p70, %p71
      %p74 = scmp.ne.s32.totalorder %s57, %s73
      %p75 = scmp.eq.s32.totalorder %s26, 0
      %p76 = por %p74, %p75
      %s77 = ssub.s32 %s20, %s27
      %p78 = scmp.eq.s32.totalorder %s77, 0
      %s80 = sadd.s32 %s79, 1
      %s81 = scalar_select %p78, %s79, %s80
      %p84 = pneg %p78
      %p85 = scmp.eq.s32.totalorder %s20, 1
      %p86 = por %p84, %p85
      %p87 = scmp.ne.s32.totalorder %s79, %s82
      %p88 = scmp.eq.s32.totalorder %s20, 0
      %p89 = por %p87, %p88
      %p90 = scmp.ne.s32.totalorder %s79, %s82
      %p91 = scmp.eq.s32.totalorder %s25, 1
      %p92 = por %p90, %p91
      %p93 = scmp.ne.s32.totalorder %s82, %s83
      %p94 = scmp.eq.s32.totalorder %s25, 0
      %p95 = por %p93, %p94
      %p96 = scmp.ne.s32.totalorder %s82, %s83
      %p97 = scmp.eq.s32.totalorder %s26, 1
      %p98 = por %p96, %p97
      %p100 = scmp.ne.s32.totalorder %s83, %s99
      %p101 = scmp.eq.s32.totalorder %s26, 0
      %p102 = por %p100, %p101
      %p103 = scmp.le.s32.totalorder 1, %s20
      %p104 = scmp.lt.s32.totalorder %s20, 3
      %p105 = pnand %p103, %p104
      %p106 = pneg %p105
      // Predicated region
      $region9: #{tpu_custom_call.1} parent=5 // pred_check
        _
      $region10: #{tpu_custom_call.1} parent=5 // pred_check_branch
        %108 = sbr.rel (%p105) target = $region12
      $region11: #{tpu_custom_call.1} parent=5 // pred_region
        %s109 = ssub.s32 %s20, 1
        // Predicated region
        $region13: #{tpu_custom_call.1} parent=11 // pred_check
          %p110 = pneg %p41
        $region14: #{tpu_custom_call.1} parent=11 // pred_check_branch
          %112 = sbr.rel (%p110) target = $region16
        $region15: #{tpu_custom_call.1} parent=11 // pred_region
          %s114 = ssub.s32 64, 64
          %115 = vsyncadd [#allocation5], %s114
          %s117 = sshll.u32 [#allocation4], 4
          %s118 = int_to_ptr.vmem [resolvable:$true] %s117
          %120 = dma.hbm_to_vmem [thread:$0]  %s1, 64, %s118, [#allocation5]
        $region16: #{tpu_custom_call.1} parent=11 // pred_fallthru
          _
      $region12: #{tpu_custom_call.1} parent=5 // pred_fallthru
        _
      %p121 = scmp.lt.s32.totalorder %s20, 2
      // Predicated region
      $region17: #{tpu_custom_call.1} parent=5 // pred_check
        %p122 = pneg %p121
      $region18: #{tpu_custom_call.1} parent=5 // pred_check_branch
        %124 = sbr.rel (%p122) target = $region20
      $region19: #{tpu_custom_call.1} parent=5 // pred_region
        // Predicated region
        $region21: #{tpu_custom_call.1} parent=19 // pred_check
          %p125 = pneg %p63
        $region22: #{tpu_custom_call.1} parent=19 // pred_check_branch
          %127 = sbr.rel (%p125) target = $region24
        $region23: #{tpu_custom_call.1} parent=19 // pred_region
          %s128 = sand.u32 %s53, 1
          %s129 = scalar_lea.sflag [#allocation8], %s128
          %s130 = sand.u32 %s53, 1
          %s131 = smul.addr %s130, 16
          %s132 = scalar_lea.vmem [#allocation7], %s131
          %s133 = sld [smem:[#allocation3 + %s20]]
          %s135 = ssub.s32 256, 256
          %136 = vsyncadd %s129, %s135
          %s137 = smul.addr %s133, 4
          %s138 = smul.addr %s137, 64
          %s139 = scalar_lea.hbm %s2, %s138
          %s140 = sshll.u32 %s132, 4
          %s141 = int_to_ptr.vmem [resolvable:$true] %s140
          %146 = dma.hbm_to_vmem [thread:$0]  %s139, 256, %s141, %s129, 64, 64, 4
        $region24: #{tpu_custom_call.1} parent=19 // pred_fallthru
          _
      $region20: #{tpu_custom_call.1} parent=5 // pred_fallthru
        _
      %p147 = scmp.le.s32.totalorder 1, %s20
      %p148 = scmp.lt.s32.totalorder %s20, 3
      %p149 = pnand %p147, %p148
      %p150 = pneg %p149
      // Predicated region
      $region25: #{tpu_custom_call.1} parent=5 // pred_check
        _
      $region26: #{tpu_custom_call.1} parent=5 // pred_check_branch
        %152 = sbr.rel (%p149) target = $region28
      $region27: #{tpu_custom_call.1} parent=5 // pred_region
        %s153 = ssub.s32 %s20, 1
        // Predicated region
        $region29: #{tpu_custom_call.1} parent=27 // pred_check
          %p154 = pneg %p41
        $region30: #{tpu_custom_call.1} parent=27 // pred_check_branch
          %156 = sbr.rel (%p154) target = $region32
        $region31: #{tpu_custom_call.1} parent=27 // pred_region
          %157 = dma.done [#allocation5], 64
        $region32: #{tpu_custom_call.1} parent=27 // pred_fallthru
          _
        %s158 = sand.u32 %s56, 1
        %s159 = scalar_lea.sflag [#allocation8], %s158
        %s160 = sand.u32 %s56, 1
        %s161 = smul.addr %s160, 16
        %s162 = scalar_lea.vmem [#allocation7], %s161
        // Predicated region
        $region33: #{tpu_custom_call.1} parent=27 // pred_check
          %p163 = pneg %p69
        $region34: #{tpu_custom_call.1} parent=27 // pred_check_branch
          %165 = sbr.rel (%p163) target = $region36
        $region35: #{tpu_custom_call.1} parent=27 // pred_region
          %166 = dma.done %s159, 256
        $region36: #{tpu_custom_call.1} parent=27 // pred_fallthru
          _
        %p167 = pneg %p41
        %p168 = pneg %p38
        %s169 = sand.u32 %s56, 1
        %s170 = scalar_lea.sflag [#allocation8], %s169
        %s171 = sand.u32 %s56, 1
        %s172 = smul.addr %s171, 16
        %s173 = scalar_lea.vmem [#allocation7], %s172
        %p174 = pneg %p69
        %p175 = pneg %p66
        %p176 = pneg %p95
        %p177 = pneg %p92
        %s178 = sand.u32 %s82, 1
        %s179 = scalar_lea.sflag [#allocation6], %s178
        %s180 = sand.u32 %s82, 1
        %s181 = smul.addr %s180, 8
        %s182 = scalar_lea.vmem [#allocation9], %s181
        %s183 = sld [smem:[#allocation3 + %s25]]
        %v185 = vld [vmem:[#allocation4] sm:$0xf]
        %v186 = vld [vmem:[%s162] sm:$0xf]
        %v187 = vld [vmem:[%s162 + $0x4] sm:$0xf]
        %v188 = vld [vmem:[%s162 + $0x8] sm:$0xf]
        %v189 = vld [vmem:[%s162 + $0xc] sm:$0xf]
        %v194 = vunpack.c.l.b16 %v186
        %v195 = vunpack.c.l.b16 %v187
        %v196 = vunpack.c.l.b16 %v188
        %v197 = vunpack.c.l.b16 %v189
        %v198 = vpack.c.b16 %v195, %v194
        %v199 = vpack.c.b16 %v197, %v196
        %vm202 = vcmask 261120
        %v204 = vsel %vm202, %v185, 0
        %206 = vmatprep.subr.bf16.mxu0 0
        %207 = vmatpush1.bf16.msra.mxu0 0
        %208 = vmatprep.subr.bf16.mxu0 0
        %209 = vmatpush1.bf16.msra.mxu0 0
        %210 = vmatprep.subr.bf16.mxu0 0
        %211 = vmatpush1.bf16.msra.mxu0 0
        %212 = vmatprep.subr.bf16.mxu0 0
        %213 = vmatpush1.bf16.msra.mxu0 0
        %214 = vmatprep.subr.bf16.mxu0 0
        %215 = vmatpush1.bf16.msra.mxu0 0
        %216 = vmatprep.subr.bf16.mxu0 0
        %217 = vmatpush1.bf16.msra.mxu0 0
        %218 = vmatprep.subr.bf16.mxu0 0
        %219 = vmatpush1.bf16.msra.mxu0 %v199
        %220 = vmatprep.subr.bf16.mxu0 0
        %221 = vmatpush1.bf16.msra.mxu0 %v198
        %222 = vmatprep.subr.bf16.mxu0 0
        %223 = vmatpush2.bf16.msra.mxu0 0
        %224 = vmatprep.subr.bf16.mxu0 0
        %225 = vmatpush2.bf16.msra.mxu0 0
        %226 = vmatprep.subr.bf16.mxu0 0
        %227 = vmatpush2.bf16.msra.mxu0 0
        %228 = vmatprep.subr.bf16.mxu0 0
        %229 = vmatpush2.bf16.msra.mxu0 0
        %230 = vmatprep.subr.bf16.mxu0 0
        %231 = vmatpush2.bf16.msra.mxu0 0
        %232 = vmatprep.subr.bf16.mxu0 0
        %233 = vmatpush2.bf16.msra.mxu0 0
        %234 = vmatprep.subr.bf16.mxu0 0
        %235 = vmatpush2.bf16.msra.mxu0 0
        %236 = vmatprep.subr.bf16.mxu0 0
        %237 = vmatpush2.bf16.msra.mxu0 0
        %238 = vmatprep.mubr.bf16.mxu0 0
        %239 = vmatmul.mubr.bf16.gmra.mxu0 %v204
        %v240 = vpop.f32.mrf.mxu0
        %v241 = vadd.f32 0.0, %v240
        %v242 = vpop.f32.mrf.mxu0
        %v243 = vpop.f32.mrf.mxu0
        %v244 = vpop.f32.mrf.mxu0
        %245 = vdwg.mxu0
        %246 = vst [vmem:[%s182] sm:$0xff] %v241
        %s247 = sand.u32 %s82, 1
        %s248 = scalar_lea.sflag [#allocation6], %s247
        %s249 = sand.u32 %s82, 1
        %s250 = smul.addr %s249, 8
        %s251 = scalar_lea.vmem [#allocation9], %s250
        // Predicated region
        $region37: #{tpu_custom_call.1} parent=27 // pred_check
          %p252 = pneg %p92
        $region38: #{tpu_custom_call.1} parent=27 // pred_check_branch
          %254 = sbr.rel (%p252) target = $region40
        $region39: #{tpu_custom_call.1} parent=27 // pred_region
          %s256 = ssub.s32 128, 128
          %257 = vsyncadd %s248, %s256
          %s258 = smul.addr %s25, 128
          %s259 = scalar_lea.hbm %s3, %s258
          %s261 = sshll.u32 %s251, 4
          %s262 = int_to_ptr.vmem [resolvable:$true] %s261
          %264 = dma.vmem_to_hbm [thread:$0]  %s262, 128, %s259, %s248
        $region40: #{tpu_custom_call.1} parent=27 // pred_fallthru
          _
      $region28: #{tpu_custom_call.1} parent=5 // pred_fallthru
        _
      %p265 = scmp.le.s32.totalorder 2, %s20
      // Predicated region
      $region41: #{tpu_custom_call.1} parent=5 // pred_check
        %p266 = pneg %p265
      $region42: #{tpu_custom_call.1} parent=5 // pred_check_branch
        %268 = sbr.rel (%p266) target = $region44
      $region43: #{tpu_custom_call.1} parent=5 // pred_region
        %s269 = ssub.s32 %s20, 2
        // Predicated region
        $region45: #{tpu_custom_call.1} parent=43 // pred_check
          %p270 = pneg %p98
        $region46: #{tpu_custom_call.1} parent=43 // pred_check_branch
          %272 = sbr.rel (%p270) target = $region48
        $region47: #{tpu_custom_call.1} parent=43 // pred_region
          %s273 = sand.u32 %s83, 1
          %s274 = scalar_lea.sflag [#allocation6], %s273
          %s275 = sand.u32 %s83, 1
          %s276 = smul.addr %s275, 8
          %s277 = scalar_lea.vmem [#allocation9], %s276
          %278 = dma.done %s274, 128
        $region48: #{tpu_custom_call.1} parent=43 // pred_fallthru
          _
      $region44: #{tpu_custom_call.1} parent=5 // pred_fallthru
        _
    $region6: #{tpu_custom_call.1} parent=1 // loop_footer
      %s24 = sadd.s32 1, %s20
    $region7: #{tpu_custom_call.1} parent=1 // loop_footer_branch
      %19 = sbr.rel target = $region3
    $region8: #{tpu_custom_call.1} parent=1 // loop_exit
      _
    %279 = vsyncpa [#allocation5], 1
    %s280 = scalar_lea.sflag [#allocation5], 1
    %281 = vsyncpa %s280, 1
    %282 = vsyncpa [#allocation8], 1
    %s283 = scalar_lea.sflag [#allocation8], 1
    %284 = vsyncpa %s283, 1
    %285 = vsyncpa [#allocation6], 1
    %s286 = scalar_lea.sflag [#allocation6], 1
    %287 = vsyncpa %s286, 1

</llo_original>
